<compile_context>
chip_gen: v7x
topology: tpu7x:2x2x1
jax: 0.10.0
libtpu: 0.0.40
codegen_flags: <defaults>
</compile_context>

<pallas_src>
import functools

import jax
import jax.numpy as jnp
from jax.experimental import pallas as pl
from jax.experimental.pallas import tpu as pltpu

_NEG_BIG = -1e30


# ---------------------------------------------------------------------------
# Projection kernel: row-tiled  out = x @ w  (bf16 operands, f32 accumulate)
# ---------------------------------------------------------------------------
def _proj_kernel(x_ref, w_ref, o_ref):
    o_ref[...] = jnp.dot(
        x_ref[...].astype(jnp.bfloat16),
        w_ref[...].astype(jnp.bfloat16),
        preferred_element_type=jnp.float32,
    )


def project(x, w, *, tile_rows):
    n, f_in = x.shape
    f_out = w.shape[1]
    return pl.pallas_call(
        _proj_kernel,
        out_shape=jax.ShapeDtypeStruct((n, f_out), jnp.float32),
        grid=(n // tile_rows,),
        in_specs=[
            pl.BlockSpec((tile_rows, f_in), lambda i: (i, 0)),
            pl.BlockSpec((f_in, f_out), lambda i: (0, 0)),
        ],
        out_specs=pl.BlockSpec((tile_rows, f_out), lambda i: (i, 0)),
        compiler_params=pltpu.CompilerParams(
            dimension_semantics=("parallel",),
            vmem_limit_bytes=48 * 1024 * 1024,
        ),
    )(x, w)


# ---------------------------------------------------------------------------
# Attention kernel: grid = (dst_tiles, src_tiles), online softmax over src
# ---------------------------------------------------------------------------
def _attn_kernel(*refs, num_heads, head_dim, negative_slope, apply_elu,
                 has_residual):
    if has_residual:
        (nnz_ref, fdst_ref, fsrc_ref, fsrcT_ref, attnT_ref, adj_ref, res_ref,
         out_ref, m_scr, l_scr, acc_scr) = refs
    else:
        (nnz_ref, fdst_ref, fsrc_ref, fsrcT_ref, attnT_ref, adj_ref,
         out_ref, m_scr, l_scr, acc_scr) = refs
        res_ref = None

    i = pl.program_id(0)          # dst tile ("parallel")
    j = pl.program_id(1)          # src tile ("arbitrary", reduction)

    @pl.when(j == 0)
    def _init():
        m_scr[...] = jnp.full_like(m_scr, _NEG_BIG)
        l_scr[...] = jnp.zeros_like(l_scr)
        acc_scr[...] = jnp.zeros_like(acc_scr)

    @pl.when(nnz_ref[i, j] > 0)   # skip adjacency blocks containing no edges
    def _update():
        maskf = adj_ref[...].astype(jnp.float32)         # (Td, Ts) int8 -> f32
        mask = maskf > 0.0
        fdst = fdst_ref[...]                             # (Td, H*D)  f32
        fsrcT = fsrcT_ref[...]                           # (H*D, Ts)  f32
        fsrc_b = fsrc_ref[...].astype(jnp.bfloat16)      # (Ts, H*D)  bf16 (MXU)
        attnT = attnT_ref[...]                           # (D, H)

        for h in range(num_heads):
            lo = h * head_dim
            hi = lo + head_dim
            fd = fdst[:, lo:hi]                          # (Td, D)

            # GATv2 (share_weights): e[v,u] = a . leaky_relu(W h_u + W h_v)
            # accumulated as lane-dense (Td, Ts) tiles (src on lanes).
            e = None
            for dd in range(head_dim):
                col = fd[:, dd:dd + 1]                   # (Td, 1)
                row = fsrcT[lo + dd:lo + dd + 1, :]      # (1, Ts)
                s = col + row                            # (Td, Ts)
                s = jnp.where(s >= 0.0, s, negative_slope * s)
                term = s * attnT[dd:dd + 1, h:h + 1]     # (Td, Ts)
                e = term if e is None else e + term
            e = jnp.where(mask, e, _NEG_BIG)

            # flash-style online softmax over the src axis
            m_prev = m_scr[:, h:h + 1]                                  # (Td, 1)
            m_new = jnp.maximum(m_prev, jnp.max(e, axis=1, keepdims=True))
            p = jnp.exp(e - m_new) * maskf    # non-edges / isolated rows -> 0
            corr = jnp.exp(m_prev - m_new)                              # (Td, 1)

            l_prev = l_scr[:, h:h + 1]
            l_scr[:, h:h + 1] = corr * l_prev + jnp.sum(p, axis=1, keepdims=True)
            pv = jnp.dot(p.astype(jnp.bfloat16), fsrc_b[:, lo:hi],
                         preferred_element_type=jnp.float32)            # (Td, D)
            acc_scr[:, lo:hi] = corr * acc_scr[:, lo:hi] + pv
            m_scr[:, h:h + 1] = m_new

    @pl.when(j == pl.num_programs(1) - 1)
    def _finalize():
        for h in range(num_heads):
            lo = h * head_dim
            hi = lo + head_dim
            # normalize once per dst row (EUP reciprocal) instead of an
            # O(N^2) divide; guard rows with zero in-degree.
            inv = pl.reciprocal(jnp.maximum(l_scr[:, h:h + 1], 1e-20),
                                approx=True)
            oh = acc_scr[:, lo:hi] * inv
            if has_residual:
                oh = oh + res_ref[:, lo:hi]
            if apply_elu:
                oh = jnp.where(oh > 0.0, oh, jnp.expm1(oh))
            out_ref[:, lo:hi] = oh.astype(out_ref.dtype)


def gatv2_attention(feat, featT, attnT, adj_i8, block_nnz, res, *,
                    num_heads, head_dim, negative_slope, apply_elu,
                    t_dst, t_src):
    n = feat.shape[0]
    hd = num_heads * head_dim
    has_residual = res is not None
    grid = (n // t_dst, n // t_src)

    kernel = functools.partial(
        _attn_kernel,
        num_heads=num_heads, head_dim=head_dim,
        negative_slope=negative_slope, apply_elu=apply_elu,
        has_residual=has_residual,
    )

    in_specs = [
        pl.BlockSpec((t_dst, hd), lambda i, j, nnz: (i, 0)),      # feat (dst)
        pl.BlockSpec((t_src, hd), lambda i, j, nnz: (j, 0)),      # feat (src, matmul)
        pl.BlockSpec((hd, t_src), lambda i, j, nnz: (0, j)),      # feat^T (src, scores)
        pl.BlockSpec((head_dim, num_heads), lambda i, j, nnz: (0, 0)),  # attn^T
        pl.BlockSpec((t_dst, t_src), lambda i, j, nnz: (i, j)),   # adjacency (int8)
    ]
    operands = [feat, feat, featT, attnT, adj_i8]
    if has_residual:
        in_specs.append(pl.BlockSpec((t_dst, hd), lambda i, j, nnz: (i, 0)))
        operands.append(res)

    grid_spec = pltpu.PrefetchScalarGridSpec(
        num_scalar_prefetch=1,
        grid=grid,
        in_specs=in_specs,
        out_specs=pl.BlockSpec((t_dst, hd), lambda i, j, nnz: (i, 0)),
        scratch_shapes=[
            pltpu.VMEM((t_dst, num_heads), jnp.float32),   # running max
            pltpu.VMEM((t_dst, num_heads), jnp.float32),   # running sum
            pltpu.VMEM((t_dst, hd), jnp.float32),          # un-normalized acc
        ],
    )

    cost = pl.CostEstimate(
        flops=int(7 * num_heads * n * n * head_dim + 2 * num_heads * n * n),
        transcendentals=int(num_heads * n * n),
        bytes_accessed=int(n * n + 4 * n * hd * 4),
    )

    return pl.pallas_call(
        kernel,
        out_shape=jax.ShapeDtypeStruct((n, hd), jnp.float32),
        grid_spec=grid_spec,
        compiler_params=pltpu.CompilerParams(
            dimension_semantics=("parallel", "arbitrary"),
            # 128x128 tiles keep the per-step working set << v7x's 64 MiB VMEM.
            vmem_limit_bytes=48 * 1024 * 1024,
        ),
        cost_estimate=cost,
    )(block_nnz, *operands)


# ---------------------------------------------------------------------------
# Layer / model wrappers
# ---------------------------------------------------------------------------
def gatv2_conv(h, p, adj_i8, block_nnz, *, t_dst, t_src, negative_slope):
    num_heads, head_dim = p["num_heads"], p["head_dim"]
    hd = num_heads * head_dim
    mode = p["residual"]                # "none" | "identity" | "proj"
    if mode == "proj":
        proj = project(h, p["w_cat"], tile_rows=t_dst)   # fused [W | Wres]
        feat, res = proj[:, :hd], proj[:, hd:]
    else:
        feat = project(h, p["w"], tile_rows=t_dst)
        res = h if mode == "identity" else None          # no matmul burned
    featT = feat.T          # layout plumbing: lane-dense src rows for scoring
    return gatv2_attention(feat, featT, p["attn_t"], adj_i8, block_nnz, res,
                           num_heads=num_heads, head_dim=head_dim,
                           negative_slope=negative_slope,
                           apply_elu=p["apply_elu"],
                           t_dst=t_dst, t_src=t_src)


def init_params(key, in_dim, num_hidden, num_classes, heads, num_layers):
    params = []
    keys = jax.random.split(key, 3 * (num_layers + 1))
    f_in = in_dim
    for l in range(num_layers):                      # hidden GATv2Conv layers
        num_heads, head_dim = heads[l], num_hidden
        w = 0.1 * jax.random.normal(keys[3 * l], (f_in, num_heads * head_dim),
                                    jnp.float32)
        attn = 0.1 * jax.random.normal(keys[3 * l + 1], (num_heads, head_dim),
                                       jnp.float32)
        if l == 0:
            layer = dict(w=w, residual="none")                  # residual=False
        elif f_in == num_heads * head_dim:
            layer = dict(w=w, residual="identity")              # DGL Identity
        else:
            res_w = 0.1 * jax.random.normal(keys[3 * l + 2],
                                            (f_in, num_heads * head_dim),
                                            jnp.float32)
            layer = dict(w_cat=jnp.concatenate([w, res_w], axis=1),
                         residual="proj")                       # learned proj
        layer.update(attn_t=attn.T, num_heads=num_heads, head_dim=head_dim,
                     apply_elu=True)
        params.append(layer)
        f_in = num_heads * head_dim
    # output layer: num_classes per head, residual=True, no activation
    num_heads, head_dim = heads[-1], num_classes
    w = 0.1 * jax.random.normal(keys[3 * num_layers],
                                (f_in, num_heads * head_dim), jnp.float32)
    attn = 0.1 * jax.random.normal(keys[3 * num_layers + 1],
                                   (num_heads, head_dim), jnp.float32)
    if f_in == num_heads * head_dim:
        layer = dict(w=w, residual="identity")
    else:
        res_w = 0.1 * jax.random.normal(keys[3 * num_layers + 2],
                                        (f_in, num_heads * head_dim),
                                        jnp.float32)
        layer = dict(w_cat=jnp.concatenate([w, res_w], axis=1), residual="proj")
    layer.update(attn_t=attn.T, num_heads=num_heads, head_dim=head_dim,
                 apply_elu=False)
    params.append(layer)
    return params


def _pick_tile(n):
    for t in (128, 64, 32, 16, 8):
        if n % t == 0:
            return t
    return n


def block_edge_counts(adj_i8, t_dst, t_src):
    n_dst, n_src = adj_i8.shape
    blocks = adj_i8.reshape(n_dst // t_dst, t_dst, n_src // t_src, t_src)
    return (blocks != 0).sum(axis=(1, 3)).astype(jnp.int32)


def gatv2_forward(params, adj, x, negative_slope=0.2):
    n = x.shape[0]
    t_dst = _pick_tile(n)
    t_src = _pick_tile(n)
    adj_i8 = (adj != 0).astype(jnp.int8)       # int8 mask: 4x less traffic vs f32
    block_nnz = block_edge_counts(adj_i8, t_dst, t_src)
    h = x
    for p in params[:-1]:
        # .flatten(1) is implicit: kernel output is already head-major (N, H*D)
        h = gatv2_conv(h, p, adj_i8, block_nnz, t_dst=t_dst, t_src=t_src,
                       negative_slope=negative_slope)
    p = params[-1]
    out = gatv2_conv(h, p, adj_i8, block_nnz, t_dst=t_dst, t_src=t_src,
                     negative_slope=negative_slope)
    # final layer: mean over heads -> (N, num_classes)
    return out.reshape(n, p["num_heads"], p["head_dim"]).mean(axis=1)


if __name__ == "__main__":
    N = 256
    in_dim = 16
    num_hidden = 8
    num_classes = 4
    heads = [2, 2, 2]
    num_layers = 2
    negative_slope = 0.2

    key = jax.random.PRNGKey(0)
    kx, kadj, kp = jax.random.split(key, 3)

    x = jax.random.normal(kx, (N, in_dim), jnp.float32)

    # two-community random graph + self loops: off-diagonal 128x128 adjacency
    # blocks are empty, exercising the scalar-prefetch block-skip path.
    half = N // 2
    rnd = jax.random.uniform(kadj, (N, N))
    comm = jnp.zeros((N, N), jnp.float32)
    comm = comm.at[:half, :half].set(1.0).at[half:, half:].set(1.0)
    adj = (rnd < 0.05).astype(jnp.float32) * comm
    adj = jnp.maximum(adj, jnp.eye(N, dtype=jnp.float32))    # adj[dst, src]

    params = init_params(kp, in_dim, num_hidden, num_classes, heads, num_layers)

    logits = gatv2_forward(params, adj, x, negative_slope)
    logits = jax.block_until_ready(logits)
    assert logits.shape == (N, num_classes)
    assert bool(jnp.all(jnp.isfinite(logits)))
    print("KERNEL_OK")
</pallas_src>

<mosaic_0001>
module attributes {stable_mosaic.version = 11 : i64} {
  func.func @_proj_kernel(%arg0: i32, %arg1: memref<128x16xf32, #tpu.memory_space<vmem>>, %arg2: memref<16x16xf32, #tpu.memory_space<vmem>>, %arg3: memref<128x16xf32, #tpu.memory_space<vmem>>) attributes {dimension_semantics = [#tpu.dimension_semantics<parallel>], iteration_bounds = array<i64: 2>, scalar_prefetch = 0 : i64, scratch_operands = 0 : i64, tpu.core_type = #tpu.core_type<tc>, window_params = [{transform_indices = @transform_0, window_bounds = array<i64: 128, 16>}, {pipeline_mode = #tpu.pipeline_mode<synchronous>, transform_indices = @transform_1, window_bounds = array<i64: 16, 16>}, {transform_indices = @transform_2, window_bounds = array<i64: 128, 16>}]} {
    %c0 = arith.constant 0 : index
    %c0_0 = arith.constant 0 : index
    %0 = vector.load %arg1[%c0, %c0_0] : memref<128x16xf32, #tpu.memory_space<vmem>>, vector<128x16xf32>
    %1 = arith.truncf %0 : vector<128x16xf32> to vector<128x16xbf16>
    %c0_1 = arith.constant 0 : index
    %c0_2 = arith.constant 0 : index
    %2 = vector.load %arg2[%c0_1, %c0_2] : memref<16x16xf32, #tpu.memory_space<vmem>>, vector<16x16xf32>
    %3 = arith.truncf %2 : vector<16x16xf32> to vector<16x16xbf16>
    %cst = arith.constant dense<0.000000e+00> : vector<128x16xf32>
    %4 = tpu.matmul %1, %3, %cst {dimension_numbers = #tpu.dot_dimension_numbers<[1], [0], [0], [1], [0, 0, 1, 1], [], []>} : vector<128x16xbf16>, vector<16x16xbf16>, vector<128x16xf32> -> vector<128x16xf32>
    %c0_3 = arith.constant 0 : index
    %c0_4 = arith.constant 0 : index
    %5 = vector.load %arg3[%c0_3, %c0_4] : memref<128x16xf32, #tpu.memory_space<vmem>>, vector<128x16xf32>
    tpu.vector_store %arg3[%c0_3, %c0_4], %4 {strides = array<i32>} : memref<128x16xf32, #tpu.memory_space<vmem>>, vector<128x16xf32>,
    return
  }
  func.func @transform_0(%arg0: i32) -> (i32, i32) {
    %c0_i32 = arith.constant 0 : i32
    %c0_i32_0 = arith.constant 0 : i32
    return %arg0, %c0_i32 : i32, i32
  }
  func.func @transform_1(%arg0: i32) -> (i32, i32) {
    %c0_i32 = arith.constant 0 : i32
    %c0_i32_0 = arith.constant 0 : i32
    %c0_i32_1 = arith.constant 0 : i32
    return %c0_i32, %c0_i32_0 : i32, i32
  }
  func.func @transform_2(%arg0: i32) -> (i32, i32) {
    %c0_i32 = arith.constant 0 : i32
    %c0_i32_0 = arith.constant 0 : i32
    return %arg0, %c0_i32 : i32, i32
  }
}

</mosaic_0001>

<llo_original>
// kernel: tpu_custom_call.1
$region0: #{tpu_custom_call.1}
  #allocation0 [shape = 'u32[]', space=smem, size = 0x4, offset = 0x4, fixed_abs, tag = 'smem constant byte address 0x4 - core index']
  #allocation1 [shape = 'u32[144,128]{1,0:T(1,128)}', space=vmem, size = 0x12000, scoped, tag = 'internal scratch']
  %s0 = inlined_call_operand.vmem [shape: f32[256,16], index: 0, kind: input, shape index: {}]
  %s1 = inlined_call_operand.vmem [shape: f32[16,16], index: 1, kind: input, shape index: {}]
  %s2 = inlined_call_operand.vmem [shape: f32[256,16], index: 2, kind: output, shape index: {}]
  %s3 = sld [smem:[#allocation0]]
  $region41: #{tpu_custom_call.1} parent=0
    _
  %s5 = ssub.s32 1, %s3
  %s6 = scalar_select 0, %s5, %s3
  loop: start=0, step=1, limit=4
  $region2: #{tpu_custom_call.1} parent=0 // loop_pre_header
    _
  $region3: #{tpu_custom_call.1} parent=0 // loop_header
    %s8 = sphi 0, %s12
    %p9 = scmp.ge.s32.totalorder %s8, 4
    %s18 = sphi 0, %s20
    %s21 = sphi 0, %s18
    %s22 = sphi 0, %s21
    %s38 = sphi 0, %s22
    %s42 = sphi 0, %s42
    %s44 = sphi 0, %s42
    %s45 = sphi 0, %s44
    %s59 = sphi 0, %s45
    %s65 = sphi 0, %s67
    %s68 = sphi 0, %s65
    %s69 = sphi 0, %s68
    %s85 = sphi 0, %s69
  $region4: #{tpu_custom_call.1} parent=0 // loop_header_branch
    %11 = sbr.rel (%p9) target = $region8
  $region5: #{tpu_custom_call.1} parent=0 // loop_body
    %s13 = ssub.s32 %s8, 1
    %s14 = ssub.s32 %s8, 2
    %s15 = sadd.s32 %s8, 1
    %s16 = ssub.s32 %s8, %s15
    %p17 = scmp.eq.s32.totalorder %s16, 0
    %s19 = sadd.s32 %s18, 1
    %s20 = scalar_select %p17, %s18, %s19
    %p23 = pneg %p17
    %p24 = scmp.eq.s32.totalorder %s8, 1
    %p25 = por %p23, %p24
    %p26 = scmp.ne.s32.totalorder %s18, %s21
    %p27 = scmp.eq.s32.totalorder %s8, 0
    %p28 = por %p26, %p27
    %p29 = scmp.ne.s32.totalorder %s18, %s21
    %p30 = scmp.eq.s32.totalorder %s13, 1
    %p31 = por %p29, %p30
    %p32 = scmp.ne.s32.totalorder %s21, %s22
    %p33 = scmp.eq.s32.totalorder %s13, 0
    %p34 = por %p32, %p33
    %p35 = scmp.ne.s32.totalorder %s21, %s22
    %p36 = scmp.eq.s32.totalorder %s14, 1
    %p37 = por %p35, %p36
    %p39 = scmp.ne.s32.totalorder %s22, %s38
    %p40 = scmp.eq.s32.totalorder %s14, 0
    %p41 = por %p39, %p40
    %s43 = sadd.s32 %s42, 1
    %p46 = scmp.eq.s32.totalorder %s8, 1
    %p47 = scmp.ne.s32.totalorder %s42, %s44
    %p48 = scmp.eq.s32.totalorder %s8, 0
    %p49 = por %p47, %p48
    %p50 = scmp.ne.s32.totalorder %s42, %s44
    %p51 = scmp.eq.s32.totalorder %s13, 1
    %p52 = por %p50, %p51
    %p53 = scmp.ne.s32.totalorder %s44, %s45
    %p54 = scmp.eq.s32.totalorder %s13, 0
    %p55 = por %p53, %p54
    %p56 = scmp.ne.s32.totalorder %s44, %s45
    %p57 = scmp.eq.s32.totalorder %s14, 1
    %p58 = por %p56, %p57
    %p60 = scmp.ne.s32.totalorder %s45, %s59
    %p61 = scmp.eq.s32.totalorder %s14, 0
    %p62 = por %p60, %p61
    %s63 = ssub.s32 %s8, %s15
    %p64 = scmp.eq.s32.totalorder %s63, 0
    %s66 = sadd.s32 %s65, 1
    %s67 = scalar_select %p64, %s65, %s66
    %p70 = pneg %p64
    %p71 = scmp.eq.s32.totalorder %s8, 1
    %p72 = por %p70, %p71
    %p73 = scmp.ne.s32.totalorder %s65, %s68
    %p74 = scmp.eq.s32.totalorder %s8, 0
    %p75 = por %p73, %p74
    %p76 = scmp.ne.s32.totalorder %s65, %s68
    %p77 = scmp.eq.s32.totalorder %s13, 1
    %p78 = por %p76, %p77
    %p79 = scmp.ne.s32.totalorder %s68, %s69
    %p80 = scmp.eq.s32.totalorder %s13, 0
    %p81 = por %p79, %p80
    %p82 = scmp.ne.s32.totalorder %s68, %s69
    %p83 = scmp.eq.s32.totalorder %s14, 1
    %p84 = por %p82, %p83
    %p86 = scmp.ne.s32.totalorder %s69, %s85
    %p87 = scmp.eq.s32.totalorder %s14, 0
    %p88 = por %p86, %p87
    %p89 = scmp.le.s32.totalorder 1, %s8
    %p90 = scmp.lt.s32.totalorder %s8, 3
    %p91 = pnand %p89, %p90
    %p92 = pneg %p91
    // Predicated region
    $region9: #{tpu_custom_call.1} parent=5 // pred_check
      _
    $region10: #{tpu_custom_call.1} parent=5 // pred_check_branch
      %94 = sbr.rel (%p91) target = $region12
    $region11: #{tpu_custom_call.1} parent=5 // pred_region
      %s95 = ssub.s32 %s8, 1
      // Predicated region
      $region13: #{tpu_custom_call.1} parent=11 // pred_check
        %p96 = pneg %p55
      $region14: #{tpu_custom_call.1} parent=11 // pred_check_branch
        %98 = sbr.rel (%p96) target = $region16
      $region15: #{tpu_custom_call.1} parent=11 // pred_region
        _
      $region16: #{tpu_custom_call.1} parent=11 // pred_fallthru
        _
    $region12: #{tpu_custom_call.1} parent=5 // pred_fallthru
      _
    %p99 = scmp.lt.s32.totalorder %s8, 2
    // Predicated region
    $region17: #{tpu_custom_call.1} parent=5 // pred_check
      %p100 = pneg %p99
    $region18: #{tpu_custom_call.1} parent=5 // pred_check_branch
      %102 = sbr.rel (%p100) target = $region20
    $region19: #{tpu_custom_call.1} parent=5 // pred_region
      // Predicated region
      $region21: #{tpu_custom_call.1} parent=19 // pred_check
        %p103 = pneg %p28
      $region22: #{tpu_custom_call.1} parent=19 // pred_check_branch
        %105 = sbr.rel (%p103) target = $region24
      $region23: #{tpu_custom_call.1} parent=19 // pred_region
        %s106 = smul.u32 16, %s8
        %p107 = scmp.lt.s32.totalorder %s106, 31
        %s108 = scalar_select %p107, %s106, 31
        %s109 = smul.addr %s108, 8
        %s110 = scalar_lea.vmem %s0, %s109
        %s111 = smul.u32 16, %s8
      $region24: #{tpu_custom_call.1} parent=19 // pred_fallthru
        _
    $region20: #{tpu_custom_call.1} parent=5 // pred_fallthru
      _
    %p112 = scmp.le.s32.totalorder 1, %s8
    %p113 = scmp.lt.s32.totalorder %s8, 3
    %p114 = pnand %p112, %p113
    %p115 = pneg %p114
    // Predicated region
    $region25: #{tpu_custom_call.1} parent=5 // pred_check
      _
    $region26: #{tpu_custom_call.1} parent=5 // pred_check_branch
      %117 = sbr.rel (%p114) target = $region28
    $region27: #{tpu_custom_call.1} parent=5 // pred_region
      %s118 = ssub.s32 %s8, 1
      %s119 = smul.u32 16, %s13
      %p120 = scmp.lt.s32.totalorder %s119, 31
      %s121 = scalar_select %p120, %s119, 31
      %s122 = smul.addr %s121, 8
      %s123 = scalar_lea.vmem %s0, %s122
      %p124 = pneg %p34
      %p125 = pneg %p31
      %p126 = pneg %p55
      %p127 = pneg %p52
      %p128 = pneg %p81
      %p129 = pneg %p78
      %s130 = smul.u32 16, %s13
      %p131 = scmp.lt.s32.totalorder %s130, 31
      %s132 = scalar_select %p131, %s130, 31
      %s133 = smul.addr %s132, 8
      %s134 = scalar_lea.vmem %s2, %s133
      %s135 = smul.u32 16, %s13
      %p136 = scmp.lt.s32.totalorder %s135, 31
      %s137 = scalar_select %p136, %s135, 31
      %s138 = smul.addr %s137, 8
      %s139 = scalar_lea.vmem %s0, %s138
      %s140 = smul.u32 16, %s13
      %s141 = smul.u32 16, %s13
      %p142 = scmp.lt.s32.totalorder %s141, 31
      %s143 = scalar_select %p142, %s141, 31
      %s144 = smul.addr %s143, 8
      %s145 = scalar_lea.vmem %s2, %s144
      %s146 = smul.u32 16, %s13
      %v148 = vld [vmem:[%s139] sm:$0xff]
      %v149 = vld [vmem:[%s139 + $0x8] sm:$0xff]
      %v150 = vld [vmem:[%s139 + $0x10] sm:$0xff]
      %v151 = vld [vmem:[%s139 + $0x18] sm:$0xff]
      %v152 = vld [vmem:[%s139 + $0x20] sm:$0xff]
      %v153 = vld [vmem:[%s139 + $0x28] sm:$0xff]
      %v154 = vld [vmem:[%s139 + $0x30] sm:$0xff]
      %v155 = vld [vmem:[%s139 + $0x38] sm:$0xff]
      %v156 = vld [vmem:[%s139 + $0x40] sm:$0xff]
      %v157 = vld [vmem:[%s139 + $0x48] sm:$0xff]
      %v158 = vld [vmem:[%s139 + $0x50] sm:$0xff]
      %v159 = vld [vmem:[%s139 + $0x58] sm:$0xff]
      %v160 = vld [vmem:[%s139 + $0x60] sm:$0xff]
      %v161 = vld [vmem:[%s139 + $0x68] sm:$0xff]
      %v162 = vld [vmem:[%s139 + $0x70] sm:$0xff]
      %v163 = vld [vmem:[%s139 + $0x78] sm:$0xff]
      %v164 = vpack.c.bf16 %v149, %v148
      %v165 = vpack.c.bf16 %v151, %v150
      %v166 = vpack.c.bf16 %v153, %v152
      %v167 = vpack.c.bf16 %v155, %v154
      %v168 = vpack.c.bf16 %v157, %v156
      %v169 = vpack.c.bf16 %v159, %v158
      %v170 = vpack.c.bf16 %v161, %v160
      %v171 = vpack.c.bf16 %v163, %v162
      %v172 = vld [vmem:[%s1] sm:$0xff]
      %v173 = vld [vmem:[%s1 + $0x8] sm:$0xff]
      %v174 = vpack.c.bf16 %v173, %v172
      %vm175 = vcmask 130048
      %v177 = vsel %vm175, %v164, 0
      %v180 = vsel %vm175, %v165, 0
      %v183 = vsel %vm175, %v166, 0
      %v186 = vsel %vm175, %v167, 0
      %v189 = vsel %vm175, %v168, 0
      %v192 = vsel %vm175, %v169, 0
      %v195 = vsel %vm175, %v170, 0
      %v198 = vsel %vm175, %v171, 0
      %200 = vmatprep.subr.bf16.mxu0 0
      %201 = vmatpush1.bf16.msra.mxu0 %v174
      %202 = vmatprep.subr.bf16.mxu0 0
      %203 = vmatpush1.bf16.msra.mxu0 0
      %204 = vmatprep.subr.bf16.mxu0 0
      %205 = vmatpush1.bf16.msra.mxu0 0
      %206 = vmatprep.subr.bf16.mxu0 0
      %207 = vmatpush1.bf16.msra.mxu0 0
      %208 = vmatprep.subr.bf16.mxu0 0
      %209 = vmatpush1.bf16.msra.mxu0 0
      %210 = vmatprep.subr.bf16.mxu0 0
      %211 = vmatpush1.bf16.msra.mxu0 0
      %212 = vmatprep.subr.bf16.mxu0 0
      %213 = vmatpush1.bf16.msra.mxu0 0
      %214 = vmatprep.subr.bf16.mxu0 0
      %215 = vmatpush1.bf16.msra.mxu0 0
      %216 = vmatprep.subr.bf16.mxu0 0
      %217 = vmatpush1.bf16.msra.mxu0 0
      %218 = vmatprep.subr.bf16.mxu0 0
      %219 = vmatpush1.bf16.msra.mxu0 0
      %220 = vmatprep.subr.bf16.mxu0 0
      %221 = vmatpush1.bf16.msra.mxu0 0
      %222 = vmatprep.subr.bf16.mxu0 0
      %223 = vmatpush1.bf16.msra.mxu0 0
      %224 = vmatprep.subr.bf16.mxu0 0
      %225 = vmatpush1.bf16.msra.mxu0 0
      %226 = vmatprep.subr.bf16.mxu0 0
      %227 = vmatpush1.bf16.msra.mxu0 0
      %228 = vmatprep.subr.bf16.mxu0 0
      %229 = vmatpush1.bf16.msra.mxu0 0
      %230 = vmatprep.subr.bf16.mxu0 0
      %231 = vmatpush1.bf16.msra.mxu0 0
      %232 = vmatprep.mubr.bf16.mxu0 0
      %233 = vmatmul.mubr.bf16.gmra.mrb[0].mxu0 %v177
      %v234 = vpop.f32.mrb[0].mxu0
      %v235 = vadd.f32 0.0, %v234
      %v236 = vpop.f32.mrb[0].mxu0
      %v237 = vpop.f32.mrb[0].mxu0
      %v238 = vadd.f32 0.0, %v237
      %v239 = vpop.f32.mrb[0].mxu0
      %240 = vmatprep.mubr.bf16.mxu0 0
      %241 = vmatmul.mubr.bf16.gmra.mrb[0].mxu0 %v180
      %v242 = vpop.f32.mrb[0].mxu0
      %v243 = vadd.f32 0.0, %v242
      %v244 = vpop.f32.mrb[0].mxu0
      %v245 = vpop.f32.mrb[0].mxu0
      %v246 = vadd.f32 0.0, %v245
      %v247 = vpop.f32.mrb[0].mxu0
      %248 = vmatprep.mubr.bf16.mxu0 0
      %249 = vmatmul.mubr.bf16.gmra.mrb[0].mxu0 %v183
      %v250 = vpop.f32.mrb[0].mxu0
      %v251 = vadd.f32 0.0, %v250
      %v252 = vpop.f32.mrb[0].mxu0
      %v253 = vpop.f32.mrb[0].mxu0
      %v254 = vadd.f32 0.0, %v253
      %v255 = vpop.f32.mrb[0].mxu0
      %256 = vmatprep.mubr.bf16.mxu0 0
      %257 = vmatmul.mubr.bf16.gmra.mrb[0].mxu0 %v186
      %v258 = vpop.f32.mrb[0].mxu0
      %v259 = vadd.f32 0.0, %v258
      %v260 = vpop.f32.mrb[0].mxu0
      %v261 = vpop.f32.mrb[0].mxu0
      %v262 = vadd.f32 0.0, %v261
      %v263 = vpop.f32.mrb[0].mxu0
      %264 = vmatprep.mubr.bf16.mxu0 0
      %265 = vmatmul.mubr.bf16.gmra.mrb[0].mxu0 %v189
      %v266 = vpop.f32.mrb[0].mxu0
      %v267 = vadd.f32 0.0, %v266
      %v268 = vpop.f32.mrb[0].mxu0
      %v269 = vpop.f32.mrb[0].mxu0
      %v270 = vadd.f32 0.0, %v269
      %v271 = vpop.f32.mrb[0].mxu0
      %272 = vmatprep.mubr.bf16.mxu0 0
      %273 = vmatmul.mubr.bf16.gmra.mrb[0].mxu0 %v192
      %v274 = vpop.f32.mrb[0].mxu0
      %v275 = vadd.f32 0.0, %v274
      %v276 = vpop.f32.mrb[0].mxu0
      %v277 = vpop.f32.mrb[0].mxu0
      %v278 = vadd.f32 0.0, %v277
      %v279 = vpop.f32.mrb[0].mxu0
      %280 = vmatprep.mubr.bf16.mxu0 0
      %281 = vmatmul.mubr.bf16.gmra.mrb[0].mxu0 %v195
      %v282 = vpop.f32.mrb[0].mxu0
      %v283 = vadd.f32 0.0, %v282
      %v284 = vpop.f32.mrb[0].mxu0
      %v285 = vpop.f32.mrb[0].mxu0
      %v286 = vadd.f32 0.0, %v285
      %v287 = vpop.f32.mrb[0].mxu0
      %288 = vmatprep.mubr.bf16.mxu0 0
      %289 = vmatmul.mubr.bf16.gmra.mrb[0].mxu0 %v198
      %v290 = vpop.f32.mrb[0].mxu0
      %v291 = vadd.f32 0.0, %v290
      %v292 = vpop.f32.mrb[0].mxu0
      %v293 = vpop.f32.mrb[0].mxu0
      %v294 = vadd.f32 0.0, %v293
      %v295 = vpop.f32.mrb[0].mxu0
      %296 = vdwg.mxu0
      %297 = vst.msk [vmem:[%s145] sm:$0xff] %vm175, %v235
      %298 = vst.msk [vmem:[%s145 + $0x8] sm:$0xff] %vm175, %v238
      %299 = vst.msk [vmem:[%s145 + $0x10] sm:$0xff] %vm175, %v243
      %300 = vst.msk [vmem:[%s145 + $0x18] sm:$0xff] %vm175, %v246
      %301 = vst.msk [vmem:[%s145 + $0x20] sm:$0xff] %vm175, %v251
      %302 = vst.msk [vmem:[%s145 + $0x28] sm:$0xff] %vm175, %v254
      %303 = vst.msk [vmem:[%s145 + $0x30] sm:$0xff] %vm175, %v259
      %304 = vst.msk [vmem:[%s145 + $0x38] sm:$0xff] %vm175, %v262
      %305 = vst.msk [vmem:[%s145 + $0x40] sm:$0xff] %vm175, %v267
      %306 = vst.msk [vmem:[%s145 + $0x48] sm:$0xff] %vm175, %v270
      %307 = vst.msk [vmem:[%s145 + $0x50] sm:$0xff] %vm175, %v275
      %308 = vst.msk [vmem:[%s145 + $0x58] sm:$0xff] %vm175, %v278
      %309 = vst.msk [vmem:[%s145 + $0x60] sm:$0xff] %vm175, %v283
      %310 = vst.msk [vmem:[%s145 + $0x68] sm:$0xff] %vm175, %v286
      %311 = vst.msk [vmem:[%s145 + $0x70] sm:$0xff] %vm175, %v291
      %312 = vst.msk [vmem:[%s145 + $0x78] sm:$0xff] %vm175, %v294
      %s313 = smul.u32 16, %s13
      %p314 = scmp.lt.s32.totalorder %s313, 31
      %s315 = scalar_select %p314, %s313, 31
      %s316 = smul.addr %s315, 8
      %s317 = scalar_lea.vmem %s2, %s316
      // Predicated region
      $region29: #{tpu_custom_call.1} parent=27 // pred_check
        %p318 = pneg %p78
      $region30: #{tpu_custom_call.1} parent=27 // pred_check_branch
        %320 = sbr.rel (%p318) target = $region32
      $region31: #{tpu_custom_call.1} parent=27 // pred_region
        %s321 = smul.u32 16, %s13
      $region32: #{tpu_custom_call.1} parent=27 // pred_fallthru
        _
    $region28: #{tpu_custom_call.1} parent=5 // pred_fallthru
      _
    %p322 = scmp.le.s32.totalorder 2, %s8
    // Predicated region
    $region33: #{tpu_custom_call.1} parent=5 // pred_check
      %p323 = pneg %p322
    $region34: #{tpu_custom_call.1} parent=5 // pred_check_branch
      %325 = sbr.rel (%p323) target = $region36
    $region35: #{tpu_custom_call.1} parent=5 // pred_region
      %s326 = ssub.s32 %s8, 2
      // Predicated region
      $region37: #{tpu_custom_call.1} parent=35 // pred_check
        %p327 = pneg %p84
      $region38: #{tpu_custom_call.1} parent=35 // pred_check_branch
        %329 = sbr.rel (%p327) target = $region40
      $region39: #{tpu_custom_call.1} parent=35 // pred_region
        %s330 = smul.u32 16, %s14
        %p331 = scmp.lt.s32.totalorder %s330, 31
        %s332 = scalar_select %p331, %s330, 31
        %s333 = smul.addr %s332, 8
        %s334 = scalar_lea.vmem %s2, %s333
      $region40: #{tpu_custom_call.1} parent=35 // pred_fallthru
        _
    $region36: #{tpu_custom_call.1} parent=5 // pred_fallthru
      _
  $region6: #{tpu_custom_call.1} parent=0 // loop_footer
    %s12 = sadd.s32 1, %s8
  $region7: #{tpu_custom_call.1} parent=0 // loop_footer_branch
    %7 = sbr.rel target = $region3
  $region8: #{tpu_custom_call.1} parent=0 // loop_exit
    _

</llo_original>
